<compile_context>
chip_gen: v7x
topology: tpu7x:2x2x1
jax: 0.10.0
libtpu: 0.0.40
codegen_flags: <defaults>
</compile_context>

<pallas_src>
import functools

import jax
import jax.numpy as jnp
from jax import lax
from jax.experimental import pallas as pl
from jax.experimental.pallas import tpu as pltpu

SCALE = 256.0
SHIFT = -128.0
BN_EPS = 1e-5


# ----------------------------------------------------------------------------
# Pallas kernel: fused  relu( W_folded @ patches^T + b_folded )
#   (normalization + conv + folded BatchNorm + ReLU, all folds precomputed)
# ----------------------------------------------------------------------------
def _stem_kernel(p_ref, w_ref, b_ref, o_ref):
    # p_ref: (K_pad, TM)  raw pixel im2col patches (transposed, lane-dense)
    # w_ref: (OC, K_pad)  conv weight with 1/SCALE and BN scale folded in
    # b_ref: (OC, 1)      bias with BN bias and the SHIFT contribution folded in
    # o_ref: (OC, TM)     lane-dense output block
    y = jnp.dot(
        w_ref[...], p_ref[...],
        preferred_element_type=jnp.float32,
        precision=jax.lax.Precision.HIGHEST,
    )
    o_ref[...] = jnp.maximum(y + b_ref[...], 0.0)


def _round_up(x, m):
    return (x + m - 1) // m * m


@functools.partial(jax.jit, static_argnames=("stride", "pad"))
def img_wrap_net_forward(x, conv_w, bn_gamma, bn_beta, bn_mean, bn_var,
                         *, stride=2, pad=1):
    """x: (N, 3, H, W) float32 pixel values in [0, 255]. Returns (N, 32, OH, OW)."""
    n, c, h, w = x.shape
    oc, _, kh, kw = conv_w.shape

    # ---- glue (plain JAX): pad, im2col (K, M layout), weight/bias folding ----
    # Pad raw pixels with 128 == -SHIFT so that the folded normalization maps
    # padded positions to exactly 0 (same as zero-padding the normalized image).
    xp = jnp.pad(x, ((0, 0), (0, 0), (pad, pad), (pad, pad)),
                 constant_values=-SHIFT)
    oh = (h + 2 * pad - kh) // stride + 1
    ow = (w + 2 * pad - kw) // stride + 1

    cols = []
    for i in range(kh):
        for j in range(kw):
            cols.append(xp[:, :, i:i + stride * oh:stride, j:j + stride * ow:stride])
    col = jnp.stack(cols, axis=0).reshape(kh, kw, n, c, oh, ow)
    # (C, KH, KW, N, OH, OW) -> (K, M): K ordering matches conv_w.reshape(oc, c*kh*kw)
    patches = col.transpose(3, 0, 1, 2, 4, 5).reshape(c * kh * kw, n * oh * ow)

    # Fold pixel normalization ((x + SHIFT)/SCALE) and BatchNorm into weights/bias.
    bn_scale = bn_gamma / jnp.sqrt(bn_var + BN_EPS)                 # (OC,)
    bn_bias = bn_beta - bn_mean * bn_scale                          # (OC,)
    w2 = conv_w.reshape(oc, c * kh * kw)                            # (OC, K)
    w_folded = w2 * (bn_scale / SCALE)[:, None]                     # (OC, K)
    b_folded = (bn_bias + SHIFT * jnp.sum(w_folded, axis=1))[:, None]  # (OC, 1)

    # Pad K to a multiple of 8 and M to a tile multiple (handles ragged M).
    k = c * kh * kw
    m = n * oh * ow
    k_pad = _round_up(k, 8)
    tm = min(512, _round_up(m, 128))
    m_pad = _round_up(m, tm)
    patches = jnp.pad(patches, ((0, k_pad - k), (0, m_pad - m)))
    w_folded = jnp.pad(w_folded, ((0, 0), (0, k_pad - k)))

    out = pl.pallas_call(
        _stem_kernel,
        out_shape=jax.ShapeDtypeStruct((oc, m_pad), jnp.float32),
        grid_spec=pltpu.PrefetchScalarGridSpec(
            num_scalar_prefetch=0,
            grid=(m_pad // tm,),
            in_specs=[
                pl.BlockSpec((k_pad, tm), lambda i: (0, i)),   # patches (lane-dense)
                pl.BlockSpec((oc, k_pad), lambda i: (0, 0)),   # folded weight
                pl.BlockSpec((oc, 1), lambda i: (0, 0)),       # folded bias
            ],
            out_specs=pl.BlockSpec((oc, tm), lambda i: (0, i)),  # lane-dense store
        ),
        compiler_params=pltpu.CompilerParams(
            dimension_semantics=("parallel",)),
    )(patches, w_folded, b_folded)

    # (OC, M_pad) -> (N, OC, OH, OW)  (NCHW, matching the PyTorch module output).
    out = out[:, :m].reshape(oc, n, oh, ow).transpose(1, 0, 2, 3)
    return out


# ----------------------------------------------------------------------------
# Pure-JAX reference for verification (faithful to the PyTorch forward)
# ----------------------------------------------------------------------------
def _reference(x, conv_w, bn_gamma, bn_beta, bn_mean, bn_var, *, stride=2, pad=1):
    xn = (x + SHIFT) / SCALE
    y = lax.conv_general_dilated(
        xn, conv_w, window_strides=(stride, stride),
        padding=((pad, pad), (pad, pad)),
        dimension_numbers=("NCHW", "OIHW", "NCHW"),
        precision=lax.Precision.HIGHEST)
    scale = bn_gamma / jnp.sqrt(bn_var + BN_EPS)
    bias = bn_beta - bn_mean * scale
    y = y * scale[None, :, None, None] + bias[None, :, None, None]
    return jnp.maximum(y, 0.0)


if __name__ == "__main__":
    key = jax.random.PRNGKey(0)
    k_x, k_w, k_g, k_b, k_m, k_v = jax.random.split(key, 6)

    # Small image batch: N=2, C=3 (RGB), H=W=16, pixel values in [0, 255].
    N, C, H, W = 2, 3, 16, 16
    OC, KH, KW = 32, 3, 3

    x = jax.random.uniform(k_x, (N, C, H, W), jnp.float32, 0.0, 255.0)

    # Deterministic synthetic parameters for the stem conv + BatchNorm.
    conv_w = jax.random.normal(k_w, (OC, C, KH, KW), jnp.float32) * 0.1
    bn_gamma = 1.0 + 0.1 * jax.random.normal(k_g, (OC,), jnp.float32)
    bn_beta = 0.1 * jax.random.normal(k_b, (OC,), jnp.float32)
    bn_mean = 0.05 * jax.random.normal(k_m, (OC,), jnp.float32)
    bn_var = jnp.abs(jax.random.normal(k_v, (OC,), jnp.float32)) * 0.5 + 0.5

    out = img_wrap_net_forward(x, conv_w, bn_gamma, bn_beta, bn_mean, bn_var)
    out = jax.block_until_ready(out)

    ref = _reference(x, conv_w, bn_gamma, bn_beta, bn_mean, bn_var)
    assert out.shape == (N, OC, H // 2, W // 2), out.shape
    max_err = float(jnp.max(jnp.abs(out - ref)))
    assert jnp.allclose(out, ref, atol=1e-4, rtol=1e-4), max_err

    print("KERNEL_OK")
</pallas_src>

<mosaic_0001>
module attributes {stable_mosaic.version = 11 : i64} {
  func.func @_stem_kernel(%arg0: i32, %arg1: memref<32x128xf32, #tpu.memory_space<vmem>>, %arg2: memref<32x32xf32, #tpu.memory_space<vmem>>, %arg3: memref<32x1xf32, #tpu.memory_space<vmem>>, %arg4: memref<32x128xf32, #tpu.memory_space<vmem>>) attributes {dimension_semantics = [#tpu.dimension_semantics<parallel>], iteration_bounds = array<i64: 1>, scalar_prefetch = 0 : i64, scratch_operands = 0 : i64, tpu.core_type = #tpu.core_type<tc>, window_params = [{transform_indices = @transform_0, window_bounds = array<i64: 32, 128>}, {pipeline_mode = #tpu.pipeline_mode<synchronous>, transform_indices = @transform_1, window_bounds = array<i64: 32, 32>}, {pipeline_mode = #tpu.pipeline_mode<synchronous>, transform_indices = @transform_2, window_bounds = array<i64: 32, 1>}, {transform_indices = @transform_3, window_bounds = array<i64: 32, 128>}]} {
    %c0 = arith.constant 0 : index
    %c0_0 = arith.constant 0 : index
    %0 = vector.load %arg2[%c0, %c0_0] : memref<32x32xf32, #tpu.memory_space<vmem>>, vector<32x32xf32>
    %c0_1 = arith.constant 0 : index
    %c0_2 = arith.constant 0 : index
    %1 = vector.load %arg1[%c0_1, %c0_2] : memref<32x128xf32, #tpu.memory_space<vmem>>, vector<32x128xf32>
    %cst = arith.constant dense<0.000000e+00> : vector<32x128xf32>
    %2 = tpu.matmul %0, %1, %cst {dimension_numbers = #tpu.dot_dimension_numbers<[1], [0], [0], [1], [0, 0, 1, 1], [], []>, precision = #tpu.contract_precision<fp32>} : vector<32x32xf32>, vector<32x128xf32>, vector<32x128xf32> -> vector<32x128xf32>
    %c0_3 = arith.constant 0 : index
    %c0_4 = arith.constant 0 : index
    %3 = vector.load %arg3[%c0_3, %c0_4] : memref<32x1xf32, #tpu.memory_space<vmem>>, vector<32x1xf32>
    %4 = vector.broadcast %3 : vector<32x1xf32> to vector<32x128xf32>
    %5 = arith.addf %2, %4 : vector<32x128xf32>
    %cst_5 = arith.constant 0.000000e+00 : f32
    %6 = vector.broadcast %cst_5 : f32 to vector<32x128xf32>
    %7 = arith.maximumf %5, %6 : vector<32x128xf32>
    %c0_6 = arith.constant 0 : index
    %c0_7 = arith.constant 0 : index
    %8 = vector.load %arg4[%c0_6, %c0_7] : memref<32x128xf32, #tpu.memory_space<vmem>>, vector<32x128xf32>
    tpu.vector_store %arg4[%c0_6, %c0_7], %7 {strides = array<i32>} : memref<32x128xf32, #tpu.memory_space<vmem>>, vector<32x128xf32>,
    return
  }
  func.func @transform_0(%arg0: i32) -> (i32, i32) {
    %c0_i32 = arith.constant 0 : i32
    %c0_i32_0 = arith.constant 0 : i32
    return %c0_i32, %arg0 : i32, i32
  }
  func.func @transform_1(%arg0: i32) -> (i32, i32) {
    %c0_i32 = arith.constant 0 : i32
    %c0_i32_0 = arith.constant 0 : i32
    %c0_i32_1 = arith.constant 0 : i32
    return %c0_i32, %c0_i32_0 : i32, i32
  }
  func.func @transform_2(%arg0: i32) -> (i32, i32) {
    %c0_i32 = arith.constant 0 : i32
    %c0_i32_0 = arith.constant 0 : i32
    %c0_i32_1 = arith.constant 0 : i32
    return %c0_i32, %c0_i32_0 : i32, i32
  }
  func.func @transform_3(%arg0: i32) -> (i32, i32) {
    %c0_i32 = arith.constant 0 : i32
    %c0_i32_0 = arith.constant 0 : i32
    return %c0_i32, %arg0 : i32, i32
  }
}

</mosaic_0001>

<llo_original>
// kernel: img_wrap_net_forward.1
$region0: #{img_wrap_net_forward.1}
  #allocation0 [shape = 'u32[]', space=smem, size = 0x4, offset = 0x4, fixed_abs, tag = 'smem constant byte address 0x4 - core index']
  #allocation1 [shape = 'u32[144,128]{1,0:T(1,128)}', space=vmem, size = 0x12000, scoped, tag = 'internal scratch']
  %s0 = inlined_call_operand.vmem [shape: f32[32,128], index: 0, kind: input, shape index: {}]
  %s1 = inlined_call_operand.vmem [shape: f32[32,32], index: 1, kind: input, shape index: {}]
  %s2 = inlined_call_operand.vmem [shape: f32[32,1], index: 2, kind: input, shape index: {}]
  %s3 = inlined_call_operand.vmem [shape: f32[32,128], index: 3, kind: output, shape index: {}]
  %s4 = sld [smem:[#allocation0]]
  $region22: #{img_wrap_net_forward.1} parent=0
    _
  %s6 = ssub.s32 1, %s4
  %s7 = scalar_select 0, %s6, %s4
  // Predicated region
  $region2: #{img_wrap_net_forward.1} parent=0 // pred_check
    _
  $region3: #{img_wrap_net_forward.1} parent=0 // pred_check_branch
    %9 = sbr.rel (0) target = $region5
  $region4: #{img_wrap_net_forward.1} parent=0 // pred_region
    _
  $region5: #{img_wrap_net_forward.1} parent=0 // pred_fallthru
    _
  // Predicated region
  $region6: #{img_wrap_net_forward.1} parent=0 // pred_check
    _
  $region7: #{img_wrap_net_forward.1} parent=0 // pred_check_branch
    %11 = sbr.rel (0) target = $region9
  $region8: #{img_wrap_net_forward.1} parent=0 // pred_region
    _
  $region9: #{img_wrap_net_forward.1} parent=0 // pred_fallthru
    _
  // Predicated region
  $region10: #{img_wrap_net_forward.1} parent=0 // pred_check
    _
  $region11: #{img_wrap_net_forward.1} parent=0 // pred_check_branch
    %13 = sbr.rel (0) target = $region13
  $region12: #{img_wrap_net_forward.1} parent=0 // pred_region
    _
  $region13: #{img_wrap_net_forward.1} parent=0 // pred_fallthru
    _
  %v14 = vld [vmem:[%s1] sm:$0xff]
  %v15 = vld [vmem:[%s1 + $0x8] sm:$0xff]
  %v16 = vld [vmem:[%s1 + $0x10] sm:$0xff]
  %v17 = vld [vmem:[%s1 + $0x18] sm:$0xff]
  %v18 = vld [vmem:[%s0] sm:$0xff]
  %v19 = vld [vmem:[%s0 + $0x8] sm:$0xff]
  %v20 = vld [vmem:[%s0 + $0x10] sm:$0xff]
  %v21 = vld [vmem:[%s0 + $0x18] sm:$0xff]
  %v22 = vld [vmem:[%s2] sm:$0xff]
  %v23 = vld [vmem:[%s2 + $0x8] sm:$0xff]
  %v24 = vld [vmem:[%s2 + $0x10] sm:$0xff]
  %v25 = vld [vmem:[%s2 + $0x18] sm:$0xff]
  %27 = vset.pattern.permute.xlu0 0
  %28 = vperm.xlu0 %27, %v22
  %v29 = vpop.permute.xlu0 %28
  %32 = vset.pattern.permute.xlu0 0
  %33 = vperm.xlu0 %32, %v23
  %v34 = vpop.permute.xlu0 %33
  %37 = vset.pattern.permute.xlu0 0
  %38 = vperm.xlu0 %37, %v24
  %v39 = vpop.permute.xlu0 %38
  %42 = vset.pattern.permute.xlu0 0
  %43 = vperm.xlu0 %42, %v25
  %v44 = vpop.permute.xlu0 %43
  %vm46 = vcmask 261120
  %v48 = vsel %vm46, %v14, 0
  %v51 = vsel %vm46, %v15, 0
  %v54 = vsel %vm46, %v16, 0
  %v57 = vsel %vm46, %v17, 0
  %59 = vmatprep.subr.mxu0 0.0
  %v60 = vand.u32 %v18, 4294901760
  %61 = vmatpush1.msra.mxu0 %v60
  %62 = vmatprep.subr.mxu0 0.0
  %v63 = vand.u32 %v19, 4294901760
  %64 = vmatpush1.msra.mxu0 %v63
  %65 = vmatprep.subr.mxu0 0.0
  %v66 = vand.u32 %v20, 4294901760
  %67 = vmatpush1.msra.mxu0 %v66
  %68 = vmatprep.subr.mxu0 0.0
  %v69 = vand.u32 %v21, 4294901760
  %70 = vmatpush1.msra.mxu0 %v69
  %71 = vmatprep.subr.mxu0 0.0
  %72 = vmatpush1.msra.mxu0 0.0
  %73 = vmatprep.subr.mxu0 0.0
  %74 = vmatpush1.msra.mxu0 0.0
  %75 = vmatprep.subr.mxu0 0.0
  %76 = vmatpush1.msra.mxu0 0.0
  %77 = vmatprep.subr.mxu0 0.0
  %78 = vmatpush1.msra.mxu0 0.0
  %79 = vmatprep.subr.mxu0 0.0
  %80 = vmatpush1.msra.mxu0 0.0
  %81 = vmatprep.subr.mxu0 0.0
  %82 = vmatpush1.msra.mxu0 0.0
  %83 = vmatprep.subr.mxu0 0.0
  %84 = vmatpush1.msra.mxu0 0.0
  %85 = vmatprep.subr.mxu0 0.0
  %86 = vmatpush1.msra.mxu0 0.0
  %87 = vmatprep.subr.mxu0 0.0
  %88 = vmatpush1.msra.mxu0 0.0
  %89 = vmatprep.subr.mxu0 0.0
  %90 = vmatpush1.msra.mxu0 0.0
  %91 = vmatprep.subr.mxu0 0.0
  %92 = vmatpush1.msra.mxu0 0.0
  %93 = vmatprep.subr.mxu0 0.0
  %94 = vmatpush1.msra.mxu0 0.0
  %95 = vmatprep.subr.mxu0 0.0
  %96 = vmatpush1.msra.mxu0 0.0
  %97 = vmatprep.subr.mxu0 0.0
  %98 = vmatpush1.msra.mxu0 0.0
  %99 = vmatprep.subr.mxu0 0.0
  %100 = vmatpush1.msra.mxu0 0.0
  %101 = vmatprep.subr.mxu0 0.0
  %102 = vmatpush1.msra.mxu0 0.0
  %103 = vmatprep.subr.mxu0 0.0
  %104 = vmatpush1.msra.mxu0 0.0
  %105 = vmatprep.subr.mxu0 0.0
  %106 = vmatpush1.msra.mxu0 0.0
  %107 = vmatprep.subr.mxu0 0.0
  %108 = vmatpush1.msra.mxu0 0.0
  %109 = vmatprep.subr.mxu0 0.0
  %110 = vmatpush1.msra.mxu0 0.0
  %111 = vmatprep.subr.mxu0 0.0
  %112 = vmatpush1.msra.mxu0 0.0
  %113 = vmatprep.subr.mxu0 0.0
  %114 = vmatpush1.msra.mxu0 0.0
  %115 = vmatprep.subr.mxu0 0.0
  %116 = vmatpush1.msra.mxu0 0.0
  %117 = vmatprep.subr.mxu0 0.0
  %118 = vmatpush1.msra.mxu0 0.0
  %119 = vmatprep.subr.mxu0 0.0
  %120 = vmatpush1.msra.mxu0 0.0
  %121 = vmatprep.subr.mxu0 0.0
  %122 = vmatpush1.msra.mxu0 0.0
  %123 = vmatprep.subr.mxu0 0.0
  %124 = vmatpush1.msra.mxu0 0.0
  %125 = vmatprep.subr.mxu0 0.0
  %126 = vmatpush1.msra.mxu0 0.0
  %127 = vmatprep.mubr.f32.mxu0 0.0
  %v128 = vand.u32 %v48, 4294901760
  %v129 = vsub.f32 %v48, %v128
  %v130 = vand.u32 %v129, 4294901760
  %v131 = vsub.f32 %v129, %v130
  %v132 = vand.u32 %v131, 4294901760
  %133 = vmatmul.mubr.f32.gmra.mrb[0].mxu0 %v132
  %v134 = vpop.f32.mrb[0].mxu0
  %v135 = vadd.f32 %v29, %v134
  %v136 = vpop.f32.mrb[0].mxu0
  %137 = vmatprep.mubr.f32.mxu0 0.0
  %v138 = vand.u32 %v51, 4294901760
  %v139 = vsub.f32 %v51, %v138
  %v140 = vand.u32 %v139, 4294901760
  %v141 = vsub.f32 %v139, %v140
  %v142 = vand.u32 %v141, 4294901760
  %143 = vmatmul.mubr.f32.gmra.mrb[0].mxu0 %v142
  %v144 = vpop.f32.mrb[0].mxu0
  %v145 = vadd.f32 %v34, %v144
  %v146 = vpop.f32.mrb[0].mxu0
  %147 = vmatprep.mubr.f32.mxu0 0.0
  %v148 = vand.u32 %v54, 4294901760
  %v149 = vsub.f32 %v54, %v148
  %v150 = vand.u32 %v149, 4294901760
  %v151 = vsub.f32 %v149, %v150
  %v152 = vand.u32 %v151, 4294901760
  %153 = vmatmul.mubr.f32.gmra.mrb[0].mxu0 %v152
  %v154 = vpop.f32.mrb[0].mxu0
  %v155 = vadd.f32 %v39, %v154
  %v156 = vpop.f32.mrb[0].mxu0
  %157 = vmatprep.mubr.f32.mxu0 0.0
  %v158 = vand.u32 %v57, 4294901760
  %v159 = vsub.f32 %v57, %v158
  %v160 = vand.u32 %v159, 4294901760
  %v161 = vsub.f32 %v159, %v160
  %v162 = vand.u32 %v161, 4294901760
  %163 = vmatmul.mubr.f32.gmra.mrb[0].mxu0 %v162
  %v164 = vpop.f32.mrb[0].mxu0
  %v165 = vadd.f32 %v44, %v164
  %v166 = vpop.f32.mrb[0].mxu0
  %167 = vdwg.mxu0
  %168 = vmatprep.subr.mxu0 0.0
  %v169 = vand.u32 %v18, 4294901760
  %v170 = vsub.f32 %v18, %v169
  %v171 = vand.u32 %v170, 4294901760
  %v172 = vsub.f32 %v170, %v171
  %v173 = vand.u32 %v172, 4294901760
  %174 = vmatpush1.msra.mxu0 %v173
  %175 = vmatprep.subr.mxu0 0.0
  %v176 = vand.u32 %v19, 4294901760
  %v177 = vsub.f32 %v19, %v176
  %v178 = vand.u32 %v177, 4294901760
  %v179 = vsub.f32 %v177, %v178
  %v180 = vand.u32 %v179, 4294901760
  %181 = vmatpush1.msra.mxu0 %v180
  %182 = vmatprep.subr.mxu0 0.0
  %v183 = vand.u32 %v20, 4294901760
  %v184 = vsub.f32 %v20, %v183
  %v185 = vand.u32 %v184, 4294901760
  %v186 = vsub.f32 %v184, %v185
  %v187 = vand.u32 %v186, 4294901760
  %188 = vmatpush1.msra.mxu0 %v187
  %189 = vmatprep.subr.mxu0 0.0
  %v190 = vand.u32 %v21, 4294901760
  %v191 = vsub.f32 %v21, %v190
  %v192 = vand.u32 %v191, 4294901760
  %v193 = vsub.f32 %v191, %v192
  %v194 = vand.u32 %v193, 4294901760
  %195 = vmatpush1.msra.mxu0 %v194
  %196 = vmatprep.subr.mxu0 0.0
  %197 = vmatpush1.msra.mxu0 0.0
  %198 = vmatprep.subr.mxu0 0.0
  %199 = vmatpush1.msra.mxu0 0.0
  %200 = vmatprep.subr.mxu0 0.0
  %201 = vmatpush1.msra.mxu0 0.0
  %202 = vmatprep.subr.mxu0 0.0
  %203 = vmatpush1.msra.mxu0 0.0
  %204 = vmatprep.subr.mxu0 0.0
  %205 = vmatpush1.msra.mxu0 0.0
  %206 = vmatprep.subr.mxu0 0.0
  %207 = vmatpush1.msra.mxu0 0.0
  %208 = vmatprep.subr.mxu0 0.0
  %209 = vmatpush1.msra.mxu0 0.0
  %210 = vmatprep.subr.mxu0 0.0
  %211 = vmatpush1.msra.mxu0 0.0
  %212 = vmatprep.subr.mxu0 0.0
  %213 = vmatpush1.msra.mxu0 0.0
  %214 = vmatprep.subr.mxu0 0.0
  %215 = vmatpush1.msra.mxu0 0.0
  %216 = vmatprep.subr.mxu0 0.0
  %217 = vmatpush1.msra.mxu0 0.0
  %218 = vmatprep.subr.mxu0 0.0
  %219 = vmatpush1.msra.mxu0 0.0
  %220 = vmatprep.subr.mxu0 0.0
  %221 = vmatpush1.msra.mxu0 0.0
  %222 = vmatprep.subr.mxu0 0.0
  %223 = vmatpush1.msra.mxu0 0.0
  %224 = vmatprep.subr.mxu0 0.0
  %225 = vmatpush1.msra.mxu0 0.0
  %226 = vmatprep.subr.mxu0 0.0
  %227 = vmatpush1.msra.mxu0 0.0
  %228 = vmatprep.subr.mxu0 0.0
  %229 = vmatpush1.msra.mxu0 0.0
  %230 = vmatprep.subr.mxu0 0.0
  %231 = vmatpush1.msra.mxu0 0.0
  %232 = vmatprep.subr.mxu0 0.0
  %233 = vmatpush1.msra.mxu0 0.0
  %234 = vmatprep.subr.mxu0 0.0
  %235 = vmatpush1.msra.mxu0 0.0
  %236 = vmatprep.subr.mxu0 0.0
  %237 = vmatpush1.msra.mxu0 0.0
  %238 = vmatprep.subr.mxu0 0.0
  %239 = vmatpush1.msra.mxu0 0.0
  %240 = vmatprep.subr.mxu0 0.0
  %241 = vmatpush1.msra.mxu0 0.0
  %242 = vmatprep.subr.mxu0 0.0
  %243 = vmatpush1.msra.mxu0 0.0
  %244 = vmatprep.subr.mxu0 0.0
  %245 = vmatpush1.msra.mxu0 0.0
  %246 = vmatprep.subr.mxu0 0.0
  %247 = vmatpush1.msra.mxu0 0.0
  %248 = vmatprep.subr.mxu0 0.0
  %249 = vmatpush1.msra.mxu0 0.0
  %250 = vmatprep.subr.mxu0 0.0
  %251 = vmatpush1.msra.mxu0 0.0
  %252 = vmatprep.mubr.f32.mxu0 0.0
  %v253 = vand.u32 %v48, 4294901760
  %254 = vmatmul.mubr.f32.gmra.mrb[0].mxu0 %v253
  %v255 = vpop.f32.mrb[0].mxu0
  %v256 = vadd.f32 %v135, %v255
  %v257 = vpop.f32.mrb[0].mxu0
  %258 = vmatprep.mubr.f32.mxu0 0.0
  %v259 = vand.u32 %v51, 4294901760
  %260 = vmatmul.mubr.f32.gmra.mrb[0].mxu0 %v259
  %v261 = vpop.f32.mrb[0].mxu0
  %v262 = vadd.f32 %v145, %v261
  %v263 = vpop.f32.mrb[0].mxu0
  %264 = vmatprep.mubr.f32.mxu0 0.0
  %v265 = vand.u32 %v54, 4294901760
  %266 = vmatmul.mubr.f32.gmra.mrb[0].mxu0 %v265
  %v267 = vpop.f32.mrb[0].mxu0
  %v268 = vadd.f32 %v155, %v267
  %v269 = vpop.f32.mrb[0].mxu0
  %270 = vmatprep.mubr.f32.mxu0 0.0
  %v271 = vand.u32 %v57, 4294901760
  %272 = vmatmul.mubr.f32.gmra.mrb[0].mxu0 %v271
  %v273 = vpop.f32.mrb[0].mxu0
  %v274 = vadd.f32 %v165, %v273
  %v275 = vpop.f32.mrb[0].mxu0
  %276 = vdwg.mxu0
  %277 = vmatprep.subr.mxu0 0.0
  %v278 = vand.u32 %v18, 4294901760
  %v279 = vsub.f32 %v18, %v278
  %280 = vmatpush1.msra.mxu0 %v279
  %281 = vmatprep.subr.mxu0 0.0
  %v282 = vand.u32 %v19, 4294901760
  %v283 = vsub.f32 %v19, %v282
  %284 = vmatpush1.msra.mxu0 %v283
  %285 = vmatprep.subr.mxu0 0.0
  %v286 = vand.u32 %v20, 4294901760
  %v287 = vsub.f32 %v20, %v286
  %288 = vmatpush1.msra.mxu0 %v287
  %289 = vmatprep.subr.mxu0 0.0
  %v290 = vand.u32 %v21, 4294901760
  %v291 = vsub.f32 %v21, %v290
  %292 = vmatpush1.msra.mxu0 %v291
  %293 = vmatprep.subr.mxu0 0.0
  %294 = vmatpush1.msra.mxu0 0.0
  %295 = vmatprep.subr.mxu0 0.0
  %296 = vmatpush1.msra.mxu0 0.0
  %297 = vmatprep.subr.mxu0 0.0
  %298 = vmatpush1.msra.mxu0 0.0
  %299 = vmatprep.subr.mxu0 0.0
  %300 = vmatpush1.msra.mxu0 0.0
  %301 = vmatprep.subr.mxu0 0.0
  %302 = vmatpush1.msra.mxu0 0.0
  %303 = vmatprep.subr.mxu0 0.0
  %304 = vmatpush1.msra.mxu0 0.0
  %305 = vmatprep.subr.mxu0 0.0
  %306 = vmatpush1.msra.mxu0 0.0
  %307 = vmatprep.subr.mxu0 0.0
  %308 = vmatpush1.msra.mxu0 0.0
  %309 = vmatprep.subr.mxu0 0.0
  %310 = vmatpush1.msra.mxu0 0.0
  %311 = vmatprep.subr.mxu0 0.0
  %312 = vmatpush1.msra.mxu0 0.0
  %313 = vmatprep.subr.mxu0 0.0
  %314 = vmatpush1.msra.mxu0 0.0
  %315 = vmatprep.subr.mxu0 0.0
  %316 = vmatpush1.msra.mxu0 0.0
  %317 = vmatprep.subr.mxu0 0.0
  %318 = vmatpush1.msra.mxu0 0.0
  %319 = vmatprep.subr.mxu0 0.0
  %320 = vmatpush1.msra.mxu0 0.0
  %321 = vmatprep.subr.mxu0 0.0
  %322 = vmatpush1.msra.mxu0 0.0
  %323 = vmatprep.subr.mxu0 0.0
  %324 = vmatpush1.msra.mxu0 0.0
  %325 = vmatprep.subr.mxu0 0.0
  %326 = vmatpush1.msra.mxu0 0.0
  %327 = vmatprep.subr.mxu0 0.0
  %328 = vmatpush1.msra.mxu0 0.0
  %329 = vmatprep.subr.mxu0 0.0
  %330 = vmatpush1.msra.mxu0 0.0
  %331 = vmatprep.subr.mxu0 0.0
  %332 = vmatpush1.msra.mxu0 0.0
  %333 = vmatprep.subr.mxu0 0.0
  %334 = vmatpush1.msra.mxu0 0.0
  %335 = vmatprep.subr.mxu0 0.0
  %336 = vmatpush1.msra.mxu0 0.0
  %337 = vmatprep.subr.mxu0 0.0
  %338 = vmatpush1.msra.mxu0 0.0
  %339 = vmatprep.subr.mxu0 0.0
  %340 = vmatpush1.msra.mxu0 0.0
  %341 = vmatprep.subr.mxu0 0.0
  %342 = vmatpush1.msra.mxu0 0.0
  %343 = vmatprep.subr.mxu0 0.0
  %344 = vmatpush1.msra.mxu0 0.0
  %345 = vmatprep.subr.mxu0 0.0
  %346 = vmatpush1.msra.mxu0 0.0
  %347 = vmatprep.subr.mxu0 0.0
  %348 = vmatpush1.msra.mxu0 0.0
  %349 = vmatprep.mubr.f32.mxu0 0.0
  %v350 = vand.u32 %v48, 4294901760
  %v351 = vsub.f32 %v48, %v350
  %352 = vmatmul.mubr.f32.gmra.mrb[0].mxu0 %v351
  %v353 = vpop.f32.mrb[0].mxu0
  %v354 = vadd.f32 %v256, %v353
  %v355 = vpop.f32.mrb[0].mxu0
  %356 = vmatprep.mubr.f32.mxu0 0.0
  %v357 = vand.u32 %v51, 4294901760
  %v358 = vsub.f32 %v51, %v357
  %359 = vmatmul.mubr.f32.gmra.mrb[0].mxu0 %v358
  %v360 = vpop.f32.mrb[0].mxu0
  %v361 = vadd.f32 %v262, %v360
  %v362 = vpop.f32.mrb[0].mxu0
  %363 = vmatprep.mubr.f32.mxu0 0.0
  %v364 = vand.u32 %v54, 4294901760
  %v365 = vsub.f32 %v54, %v364
  %366 = vmatmul.mubr.f32.gmra.mrb[0].mxu0 %v365
  %v367 = vpop.f32.mrb[0].mxu0
  %v368 = vadd.f32 %v268, %v367
  %v369 = vpop.f32.mrb[0].mxu0
  %370 = vmatprep.mubr.f32.mxu0 0.0
  %v371 = vand.u32 %v57, 4294901760
  %v372 = vsub.f32 %v57, %v371
  %373 = vmatmul.mubr.f32.gmra.mrb[0].mxu0 %v372
  %v374 = vpop.f32.mrb[0].mxu0
  %v375 = vadd.f32 %v274, %v374
  %v376 = vpop.f32.mrb[0].mxu0
  %377 = vdwg.mxu0
  %378 = vmatprep.subr.mxu0 0.0
  %v379 = vand.u32 %v18, 4294901760
  %380 = vmatpush1.msra.mxu0 %v379
  %381 = vmatprep.subr.mxu0 0.0
  %v382 = vand.u32 %v19, 4294901760
  %383 = vmatpush1.msra.mxu0 %v382
  %384 = vmatprep.subr.mxu0 0.0
  %v385 = vand.u32 %v20, 4294901760
  %386 = vmatpush1.msra.mxu0 %v385
  %387 = vmatprep.subr.mxu0 0.0
  %v388 = vand.u32 %v21, 4294901760
  %389 = vmatpush1.msra.mxu0 %v388
  %390 = vmatprep.subr.mxu0 0.0
  %391 = vmatpush1.msra.mxu0 0.0
  %392 = vmatprep.subr.mxu0 0.0
  %393 = vmatpush1.msra.mxu0 0.0
  %394 = vmatprep.subr.mxu0 0.0
  %395 = vmatpush1.msra.mxu0 0.0
  %396 = vmatprep.subr.mxu0 0.0
  %397 = vmatpush1.msra.mxu0 0.0
  %398 = vmatprep.subr.mxu0 0.0
  %399 = vmatpush1.msra.mxu0 0.0
  %400 = vmatprep.subr.mxu0 0.0
  %401 = vmatpush1.msra.mxu0 0.0
  %402 = vmatprep.subr.mxu0 0.0
  %403 = vmatpush1.msra.mxu0 0.0
  %404 = vmatprep.subr.mxu0 0.0
  %405 = vmatpush1.msra.mxu0 0.0
  %406 = vmatprep.subr.mxu0 0.0
  %407 = vmatpush1.msra.mxu0 0.0
  %408 = vmatprep.subr.mxu0 0.0
  %409 = vmatpush1.msra.mxu0 0.0
  %410 = vmatprep.subr.mxu0 0.0
  %411 = vmatpush1.msra.mxu0 0.0
  %412 = vmatprep.subr.mxu0 0.0
  %413 = vmatpush1.msra.mxu0 0.0
  %414 = vmatprep.subr.mxu0 0.0
  %415 = vmatpush1.msra.mxu0 0.0
  %416 = vmatprep.subr.mxu0 0.0
  %417 = vmatpush1.msra.mxu0 0.0
  %418 = vmatprep.subr.mxu0 0.0
  %419 = vmatpush1.msra.mxu0 0.0
  %420 = vmatprep.subr.mxu0 0.0
  %421 = vmatpush1.msra.mxu0 0.0
  %422 = vmatprep.subr.mxu0 0.0
  %423 = vmatpush1.msra.mxu0 0.0
  %424 = vmatprep.subr.mxu0 0.0
  %425 = vmatpush1.msra.mxu0 0.0
  %426 = vmatprep.subr.mxu0 0.0
  %427 = vmatpush1.msra.mxu0 0.0
  %428 = vmatprep.subr.mxu0 0.0
  %429 = vmatpush1.msra.mxu0 0.0
  %430 = vmatprep.subr.mxu0 0.0
  %431 = vmatpush1.msra.mxu0 0.0
  %432 = vmatprep.subr.mxu0 0.0
  %433 = vmatpush1.msra.mxu0 0.0
  %434 = vmatprep.subr.mxu0 0.0
  %435 = vmatpush1.msra.mxu0 0.0
  %436 = vmatprep.subr.mxu0 0.0
  %437 = vmatpush1.msra.mxu0 0.0
  %438 = vmatprep.subr.mxu0 0.0
  %439 = vmatpush1.msra.mxu0 0.0
  %440 = vmatprep.subr.mxu0 0.0
  %441 = vmatpush1.msra.mxu0 0.0
  %442 = vmatprep.subr.mxu0 0.0
  %443 = vmatpush1.msra.mxu0 0.0
  %444 = vmatprep.subr.mxu0 0.0
  %445 = vmatpush1.msra.mxu0 0.0
  %446 = vmatprep.mubr.f32.mxu0 0.0
  %v447 = vand.u32 %v48, 4294901760
  %v448 = vsub.f32 %v48, %v447
  %v449 = vand.u32 %v448, 4294901760
  %450 = vmatmul.mubr.f32.gmra.mrb[0].mxu0 %v449
  %v451 = vpop.f32.mrb[0].mxu0
  %v452 = vadd.f32 %v354, %v451
  %v453 = vpop.f32.mrb[0].mxu0
  %454 = vmatprep.mubr.f32.mxu0 0.0
  %v455 = vand.u32 %v51, 4294901760
  %v456 = vsub.f32 %v51, %v455
  %v457 = vand.u32 %v456, 4294901760
  %458 = vmatmul.mubr.f32.gmra.mrb[0].mxu0 %v457
  %v459 = vpop.f32.mrb[0].mxu0
  %v460 = vadd.f32 %v361, %v459
  %v461 = vpop.f32.mrb[0].mxu0
  %462 = vmatprep.mubr.f32.mxu0 0.0
  %v463 = vand.u32 %v54, 4294901760
  %v464 = vsub.f32 %v54, %v463
  %v465 = vand.u32 %v464, 4294901760
  %466 = vmatmul.mubr.f32.gmra.mrb[0].mxu0 %v465
  %v467 = vpop.f32.mrb[0].mxu0
  %v468 = vadd.f32 %v368, %v467
  %v469 = vpop.f32.mrb[0].mxu0
  %470 = vmatprep.mubr.f32.mxu0 0.0
  %v471 = vand.u32 %v57, 4294901760
  %v472 = vsub.f32 %v57, %v471
  %v473 = vand.u32 %v472, 4294901760
  %474 = vmatmul.mubr.f32.gmra.mrb[0].mxu0 %v473
  %v475 = vpop.f32.mrb[0].mxu0
  %v476 = vadd.f32 %v375, %v475
  %v477 = vpop.f32.mrb[0].mxu0
  %478 = vdwg.mxu0
  %479 = vmatprep.subr.mxu0 0.0
  %v480 = vand.u32 %v18, 4294901760
  %v481 = vsub.f32 %v18, %v480
  %v482 = vand.u32 %v481, 4294901760
  %483 = vmatpush1.msra.mxu0 %v482
  %484 = vmatprep.subr.mxu0 0.0
  %v485 = vand.u32 %v19, 4294901760
  %v486 = vsub.f32 %v19, %v485
  %v487 = vand.u32 %v486, 4294901760
  %488 = vmatpush1.msra.mxu0 %v487
  %489 = vmatprep.subr.mxu0 0.0
  %v490 = vand.u32 %v20, 4294901760
  %v491 = vsub.f32 %v20, %v490
  %v492 = vand.u32 %v491, 4294901760
  %493 = vmatpush1.msra.mxu0 %v492
  %494 = vmatprep.subr.mxu0 0.0
  %v495 = vand.u32 %v21, 4294901760
  %v496 = vsub.f32 %v21, %v495
  %v497 = vand.u32 %v496, 4294901760
  %498 = vmatpush1.msra.mxu0 %v497
  %499 = vmatprep.subr.mxu0 0.0
  %500 = vmatpush1.msra.mxu0 0.0
  %501 = vmatprep.subr.mxu0 0.0
  %502 = vmatpush1.msra.mxu0 0.0
  %503 = vmatprep.subr.mxu0 0.0
  %504 = vmatpush1.msra.mxu0 0.0
  %505 = vmatprep.subr.mxu0 0.0
  %506 = vmatpush1.msra.mxu0 0.0
  %507 = vmatprep.subr.mxu0 0.0
  %508 = vmatpush1.msra.mxu0 0.0
  %509 = vmatprep.subr.mxu0 0.0
  %510 = vmatpush1.msra.mxu0 0.0
  %511 = vmatprep.subr.mxu0 0.0
  %512 = vmatpush1.msra.mxu0 0.0
  %513 = vmatprep.subr.mxu0 0.0
  %514 = vmatpush1.msra.mxu0 0.0
  %515 = vmatprep.subr.mxu0 0.0
  %516 = vmatpush1.msra.mxu0 0.0
  %517 = vmatprep.subr.mxu0 0.0
  %518 = vmatpush1.msra.mxu0 0.0
  %519 = vmatprep.subr.mxu0 0.0
  %520 = vmatpush1.msra.mxu0 0.0
  %521 = vmatprep.subr.mxu0 0.0
  %522 = vmatpush1.msra.mxu0 0.0
  %523 = vmatprep.subr.mxu0 0.0
  %524 = vmatpush1.msra.mxu0 0.0
  %525 = vmatprep.subr.mxu0 0.0
  %526 = vmatpush1.msra.mxu0 0.0
  %527 = vmatprep.subr.mxu0 0.0
  %528 = vmatpush1.msra.mxu0 0.0
  %529 = vmatprep.subr.mxu0 0.0
  %530 = vmatpush1.msra.mxu0 0.0
  %531 = vmatprep.subr.mxu0 0.0
  %532 = vmatpush1.msra.mxu0 0.0
  %533 = vmatprep.subr.mxu0 0.0
  %534 = vmatpush1.msra.mxu0 0.0
  %535 = vmatprep.subr.mxu0 0.0
  %536 = vmatpush1.msra.mxu0 0.0
  %537 = vmatprep.subr.mxu0 0.0
  %538 = vmatpush1.msra.mxu0 0.0
  %539 = vmatprep.subr.mxu0 0.0
  %540 = vmatpush1.msra.mxu0 0.0
  %541 = vmatprep.subr.mxu0 0.0
  %542 = vmatpush1.msra.mxu0 0.0
  %543 = vmatprep.subr.mxu0 0.0
  %544 = vmatpush1.msra.mxu0 0.0
  %545 = vmatprep.subr.mxu0 0.0
  %546 = vmatpush1.msra.mxu0 0.0
  %547 = vmatprep.subr.mxu0 0.0
  %548 = vmatpush1.msra.mxu0 0.0
  %549 = vmatprep.subr.mxu0 0.0
  %550 = vmatpush1.msra.mxu0 0.0
  %551 = vmatprep.subr.mxu0 0.0
  %552 = vmatpush1.msra.mxu0 0.0
  %553 = vmatprep.subr.mxu0 0.0
  %554 = vmatpush1.msra.mxu0 0.0
  %555 = vmatprep.mubr.f32.mxu0 0.0
  %v556 = vand.u32 %v48, 4294901760
  %557 = vmatmul.mubr.f32.gmra.mrb[0].mxu0 %v556
  %v558 = vpop.f32.mrb[0].mxu0
  %v559 = vadd.f32 %v452, %v558
  %v560 = vpop.f32.mrb[0].mxu0
  %561 = vmatprep.mubr.f32.mxu0 0.0
  %v562 = vand.u32 %v51, 4294901760
  %563 = vmatmul.mubr.f32.gmra.mrb[0].mxu0 %v562
  %v564 = vpop.f32.mrb[0].mxu0
  %v565 = vadd.f32 %v460, %v564
  %v566 = vpop.f32.mrb[0].mxu0
  %567 = vmatprep.mubr.f32.mxu0 0.0
  %v568 = vand.u32 %v54, 4294901760
  %569 = vmatmul.mubr.f32.gmra.mrb[0].mxu0 %v568
  %v570 = vpop.f32.mrb[0].mxu0
  %v571 = vadd.f32 %v468, %v570
  %v572 = vpop.f32.mrb[0].mxu0
  %573 = vmatprep.mubr.f32.mxu0 0.0
  %v574 = vand.u32 %v57, 4294901760
  %575 = vmatmul.mubr.f32.gmra.mrb[0].mxu0 %v574
  %v576 = vpop.f32.mrb[0].mxu0
  %v577 = vadd.f32 %v476, %v576
  %v578 = vpop.f32.mrb[0].mxu0
  %579 = vdwg.mxu0
  %580 = vmatprep.subr.mxu0 0.0
  %v581 = vand.u32 %v18, 4294901760
  %582 = vmatpush1.msra.mxu0 %v581
  %583 = vmatprep.subr.mxu0 0.0
  %v584 = vand.u32 %v19, 4294901760
  %585 = vmatpush1.msra.mxu0 %v584
  %586 = vmatprep.subr.mxu0 0.0
  %v587 = vand.u32 %v20, 4294901760
  %588 = vmatpush1.msra.mxu0 %v587
  %589 = vmatprep.subr.mxu0 0.0
  %v590 = vand.u32 %v21, 4294901760
  %591 = vmatpush1.msra.mxu0 %v590
  %592 = vmatprep.subr.mxu0 0.0
  %593 = vmatpush1.msra.mxu0 0.0
  %594 = vmatprep.subr.mxu0 0.0
  %595 = vmatpush1.msra.mxu0 0.0
  %596 = vmatprep.subr.mxu0 0.0
  %597 = vmatpush1.msra.mxu0 0.0
  %598 = vmatprep.subr.mxu0 0.0
  %599 = vmatpush1.msra.mxu0 0.0
  %600 = vmatprep.subr.mxu0 0.0
  %601 = vmatpush1.msra.mxu0 0.0
  %602 = vmatprep.subr.mxu0 0.0
  %603 = vmatpush1.msra.mxu0 0.0
  %604 = vmatprep.subr.mxu0 0.0
  %605 = vmatpush1.msra.mxu0 0.0
  %606 = vmatprep.subr.mxu0 0.0
  %607 = vmatpush1.msra.mxu0 0.0
  %608 = vmatprep.subr.mxu0 0.0
  %609 = vmatpush1.msra.mxu0 0.0
  %610 = vmatprep.subr.mxu0 0.0
  %611 = vmatpush1.msra.mxu0 0.0
  %612 = vmatprep.subr.mxu0 0.0
  %613 = vmatpush1.msra.mxu0 0.0
  %614 = vmatprep.subr.mxu0 0.0
  %615 = vmatpush1.msra.mxu0 0.0
  %616 = vmatprep.subr.mxu0 0.0
  %617 = vmatpush1.msra.mxu0 0.0
  %618 = vmatprep.subr.mxu0 0.0
  %619 = vmatpush1.msra.mxu0 0.0
  %620 = vmatprep.subr.mxu0 0.0
  %621 = vmatpush1.msra.mxu0 0.0
  %622 = vmatprep.subr.mxu0 0.0
  %623 = vmatpush1.msra.mxu0 0.0
  %624 = vmatprep.subr.mxu0 0.0
  %625 = vmatpush1.msra.mxu0 0.0
  %626 = vmatprep.subr.mxu0 0.0
  %627 = vmatpush1.msra.mxu0 0.0
  %628 = vmatprep.subr.mxu0 0.0
  %629 = vmatpush1.msra.mxu0 0.0
  %630 = vmatprep.subr.mxu0 0.0
  %631 = vmatpush1.msra.mxu0 0.0
  %632 = vmatprep.subr.mxu0 0.0
  %633 = vmatpush1.msra.mxu0 0.0
  %634 = vmatprep.subr.mxu0 0.0
  %635 = vmatpush1.msra.mxu0 0.0
  %636 = vmatprep.subr.mxu0 0.0
  %637 = vmatpush1.msra.mxu0 0.0
  %638 = vmatprep.subr.mxu0 0.0
  %639 = vmatpush1.msra.mxu0 0.0
  %640 = vmatprep.subr.mxu0 0.0
  %641 = vmatpush1.msra.mxu0 0.0
  %642 = vmatprep.subr.mxu0 0.0
  %643 = vmatpush1.msra.mxu0 0.0
  %644 = vmatprep.subr.mxu0 0.0
  %645 = vmatpush1.msra.mxu0 0.0
  %646 = vmatprep.subr.mxu0 0.0
  %647 = vmatpush1.msra.mxu0 0.0
  %648 = vmatprep.mubr.f32.mxu0 0.0
  %v649 = vand.u32 %v48, 4294901760
  %650 = vmatmul.mubr.f32.gmra.mrb[0].mxu0 %v649
  %v651 = vpop.f32.mrb[0].mxu0
  %v652 = vadd.f32 %v559, %v651
  %v653 = vpop.f32.mrb[0].mxu0
  %654 = vmatprep.mubr.f32.mxu0 0.0
  %v655 = vand.u32 %v51, 4294901760
  %656 = vmatmul.mubr.f32.gmra.mrb[0].mxu0 %v655
  %v657 = vpop.f32.mrb[0].mxu0
  %v658 = vadd.f32 %v565, %v657
  %v659 = vpop.f32.mrb[0].mxu0
  %660 = vmatprep.mubr.f32.mxu0 0.0
  %v661 = vand.u32 %v54, 4294901760
  %662 = vmatmul.mubr.f32.gmra.mrb[0].mxu0 %v661
  %v663 = vpop.f32.mrb[0].mxu0
  %v664 = vadd.f32 %v571, %v663
  %v665 = vpop.f32.mrb[0].mxu0
  %666 = vmatprep.mubr.f32.mxu0 0.0
  %v667 = vand.u32 %v57, 4294901760
  %668 = vmatmul.mubr.f32.gmra.mrb[0].mxu0 %v667
  %v669 = vpop.f32.mrb[0].mxu0
  %v670 = vadd.f32 %v577, %v669
  %v671 = vpop.f32.mrb[0].mxu0
  %672 = vdwg.mxu0
  %v673 = vmax.f32 %v652, 0.0
  %v674 = vmax.f32 %v658, 0.0
  %v675 = vmax.f32 %v664, 0.0
  %v676 = vmax.f32 %v670, 0.0
  %677 = vst [vmem:[%s3] sm:$0xff] %v673
  %678 = vst [vmem:[%s3 + $0x8] sm:$0xff] %v674
  %679 = vst [vmem:[%s3 + $0x10] sm:$0xff] %v675
  %680 = vst [vmem:[%s3 + $0x18] sm:$0xff] %v676
  // Predicated region
  $region14: #{img_wrap_net_forward.1} parent=0 // pred_check
    _
  $region15: #{img_wrap_net_forward.1} parent=0 // pred_check_branch
    %682 = sbr.rel (0) target = $region17
  $region16: #{img_wrap_net_forward.1} parent=0 // pred_region
    _
  $region17: #{img_wrap_net_forward.1} parent=0 // pred_fallthru
    _
  // Predicated region
  $region18: #{img_wrap_net_forward.1} parent=0 // pred_check
    _
  $region19: #{img_wrap_net_forward.1} parent=0 // pred_check_branch
    %684 = sbr.rel (0) target = $region21
  $region20: #{img_wrap_net_forward.1} parent=0 // pred_region
    _
  $region21: #{img_wrap_net_forward.1} parent=0 // pred_fallthru
    _

</llo_original>
